<compile_context>
chip_gen: v7x
topology: tpu7x:2x2x1
jax: 0.10.0
libtpu: 0.0.40
codegen_flags: <defaults>
</compile_context>

<pallas_src>
import jax
import jax.numpy as jnp
from jax.experimental import pallas as pl
from jax.experimental.pallas import tpu as pltpu


def _round_up(x, m):
    return ((x + m - 1) // m) * m


def _make_fused_kernel(layer_has_ln, compute_dtype):
    """Kernel applying the whole FC stack to one (tm, C_in) row tile.

    layer_has_ln: tuple[bool], per layer: LayerNorm + ReLU after the 1x1 conv
                  (i.e. activation is not None in the PyTorch module).
    compute_dtype: dtype of the matmul inputs (f32 = exact parity, bf16 =
                   native MXU path on v6e/v7x).  Accumulation, bias and
                   LayerNorm math stay float32.
    """

    def kernel(x_ref, *refs):
        o_ref = refs[-1]
        prefs = refs[:-1]
        cur = x_ref[...]
        idx = 0
        for has_ln in layer_has_ln:
            w_ref, b_ref = prefs[idx], prefs[idx + 1]
            idx += 2
            # y = x @ W + b  (1x1 conv == per-row linear); f32 MXU accumulation.
            y = jnp.dot(
                cur.astype(compute_dtype),
                w_ref[...],
                preferred_element_type=jnp.float32,
            )
            y = y + b_ref[...]
            if has_ln:
                g_ref, beta_ref = prefs[idx], prefs[idx + 1]
                idx += 2
                # LayerNorm over channels; one-pass variance.
                mu = jnp.mean(y, axis=-1, keepdims=True)
                var = jnp.mean(y * y, axis=-1, keepdims=True) - mu * mu
                var = jnp.maximum(var, 0.0)
                y = (y - mu) * jax.lax.rsqrt(var + 1e-5)
                y = y * g_ref[...] + beta_ref[...]
                # activation = ReLU
                y = jnp.maximum(y, 0.0)
            cur = y
        # Fusion => only this final (c_out-lane) store reaches HBM.
        o_ref[...] = cur.astype(o_ref.dtype)

    return kernel


def fc_forward(x_nhwc, params, *, tm=1024, compute_dtype=jnp.float32):
    """FC.forward: fused stack of conv2d(1x1) [+ LayerNorm + ReLU] layers.

    x_nhwc: (B, H, W, C_in)
    params: list of (w:(Cin,Cout), b:(1,Cout), gamma:(1,Cout)|None, beta:(1,Cout)|None)
    """
    B, H, W, c_in = x_nhwc.shape
    M = B * H * W
    c_out_final = params[-1][0].shape[1]
    layer_has_ln = tuple(g is not None for (_, _, g, _) in params)

    x2d = x_nhwc.reshape(M, c_in)

    # Tile sizing + ragged-M handling: clamp the tile to the problem, pad rows.
    tm_eff = min(tm, _round_up(M, 8))
    m_pad = _round_up(M, tm_eff)
    if m_pad != M:
        x2d = jnp.pad(x2d, ((0, m_pad - M), (0, 0)))

    def resident(shape):
        # Grid-invariant parameter block (weights/bias/gamma/beta): block index
        # never changes, so it is fetched once and stays resident in VMEM.
        return pl.BlockSpec(shape, lambda i: (0, 0))

    operands = [x2d]
    in_specs = [pl.BlockSpec((tm_eff, c_in), lambda i: (i, 0))]
    param_bytes = 0
    max_co = c_out_final
    for (w, b, gamma, beta) in params:
        ci, co = w.shape
        max_co = max(max_co, co)
        operands.append(w.astype(compute_dtype))   # one-time cast; halves W DMA in bf16
        in_specs.append(resident((ci, co)))
        param_bytes += ci * co * jnp.dtype(compute_dtype).itemsize
        operands.append(b)
        in_specs.append(resident((1, co)))
        param_bytes += co * 4
        if gamma is not None:
            operands.append(gamma)
            in_specs.append(resident((1, co)))
            operands.append(beta)
            in_specs.append(resident((1, co)))
            param_bytes += 2 * co * 4

    # Rough VMEM budget (double-buffered input/output tiles + params + the live
    # intermediate activation); raise the scoped limit only when it is needed.
    x_bytes = x2d.dtype.itemsize
    vmem_est = (2 * tm_eff * c_in * x_bytes            # input tile, double buffered
                + 2 * tm_eff * c_out_final * 4         # output tile, double buffered
                + 2 * param_bytes                      # resident params (+1 spare buf)
                + 2 * tm_eff * max_co * 4)             # widest live activation
    vmem_limit = max(32 << 20, min(128 << 20, int(1.5 * vmem_est)))

    kernel = _make_fused_kernel(layer_has_ln, compute_dtype)

    out = pl.pallas_call(
        kernel,
        out_shape=jax.ShapeDtypeStruct((m_pad, c_out_final), jnp.float32),
        grid_spec=pltpu.PrefetchScalarGridSpec(
            num_scalar_prefetch=0,
            grid=(m_pad // tm_eff,),
            in_specs=in_specs,
            out_specs=pl.BlockSpec((tm_eff, c_out_final), lambda i: (i, 0)),
        ),
        compiler_params=pltpu.CompilerParams(
            dimension_semantics=("parallel",),
            vmem_limit_bytes=vmem_limit,
        ),
    )(*operands)

    return out[:M].reshape(B, H, W, c_out_final)


def init_params(key, input_dim, output_dims, activations):
    """Deterministic parameter init mirroring nn.Conv2d / nn.LayerNorm shapes."""
    params = []
    c_in = input_dim
    for c_out, act in zip(output_dims, activations):
        key, kw, kb, kg, kbeta = jax.random.split(key, 5)
        # Conv2d weight (out, in, 1, 1) -> stored transposed as (in, out).
        w = jax.random.normal(kw, (c_in, c_out), jnp.float32) * 0.1
        b = jax.random.normal(kb, (1, c_out), jnp.float32) * 0.1
        if act is not None:
            # LayerNorm affine params (perturbed from identity, deterministic).
            gamma = 1.0 + 0.1 * jax.random.normal(kg, (1, c_out), jnp.float32)
            beta = 0.1 * jax.random.normal(kbeta, (1, c_out), jnp.float32)
        else:
            gamma, beta = None, None
        params.append((w, b, gamma, beta))
        c_in = c_out
    return params


def fc_reference(x_nhwc, params):
    """Pure-JAX reference (matches the PyTorch module's forward)."""
    cur = x_nhwc
    for (w, b, gamma, beta) in params:
        cur = jnp.einsum("bhwc,co->bhwo", cur, w) + b.reshape(-1)
        if gamma is not None:
            mu = jnp.mean(cur, axis=-1, keepdims=True)
            var = jnp.mean((cur - mu) ** 2, axis=-1, keepdims=True)
            cur = (cur - mu) * jax.lax.rsqrt(var + 1e-5)
            cur = cur * gamma.reshape(-1) + beta.reshape(-1)
            cur = jnp.maximum(cur, 0.0)
    return cur


if __name__ == "__main__":
    # FC(input_dim=16, output_dims=[32, 32], activations=[relu, None],
    #    bn=True, use_bias=True, drop=None)
    # TODO(synk): Dropout branch (drop not None) is identity at inference / omitted.
    key = jax.random.PRNGKey(0)
    key, kx = jax.random.split(key)

    B, H, W, C_in = 2, 4, 4, 16
    output_dims = [32, 32]
    activations = ["relu", None]  # last layer: plain linear (no LN / no act)

    x = jax.random.normal(kx, (B, H, W, C_in), jnp.float32)
    params = init_params(key, C_in, output_dims, activations)

    ref = fc_reference(x, params)

    # Exact-parity path (f32 matmul inputs) -- tight tolerance.
    out = jax.block_until_ready(fc_forward(x, params, compute_dtype=jnp.float32))
    assert out.shape == (B, H, W, output_dims[-1])
    assert jnp.allclose(out, ref, atol=1e-4, rtol=1e-4)

    # bf16-MXU path (v6e/v7x): f32 accumulation, looser check.
    out_bf16 = jax.block_until_ready(
        fc_forward(x, params, compute_dtype=jnp.bfloat16))
    assert out_bf16.shape == (B, H, W, output_dims[-1])
    assert jnp.allclose(out_bf16, ref, atol=5e-2, rtol=5e-2)

    print("KERNEL_OK")
</pallas_src>

<mosaic_0001>
module attributes {stable_mosaic.version = 11 : i64} {
  func.func @kernel(%arg0: i32, %arg1: memref<32x16xf32, #tpu.memory_space<vmem>>, %arg2: memref<16x32xf32, #tpu.memory_space<vmem>>, %arg3: memref<1x32xf32, #tpu.memory_space<vmem>>, %arg4: memref<1x32xf32, #tpu.memory_space<vmem>>, %arg5: memref<1x32xf32, #tpu.memory_space<vmem>>, %arg6: memref<32x32xf32, #tpu.memory_space<vmem>>, %arg7: memref<1x32xf32, #tpu.memory_space<vmem>>, %arg8: memref<32x32xf32, #tpu.memory_space<vmem>>) attributes {dimension_semantics = [#tpu.dimension_semantics<parallel>], iteration_bounds = array<i64: 1>, scalar_prefetch = 0 : i64, scratch_operands = 0 : i64, tpu.core_type = #tpu.core_type<tc>, window_params = [{transform_indices = @transform_0, window_bounds = array<i64: 32, 16>}, {pipeline_mode = #tpu.pipeline_mode<synchronous>, transform_indices = @transform_1, window_bounds = array<i64: 16, 32>}, {pipeline_mode = #tpu.pipeline_mode<synchronous>, transform_indices = @transform_2, window_bounds = array<i64: 1, 32>}, {pipeline_mode = #tpu.pipeline_mode<synchronous>, transform_indices = @transform_3, window_bounds = array<i64: 1, 32>}, {pipeline_mode = #tpu.pipeline_mode<synchronous>, transform_indices = @transform_4, window_bounds = array<i64: 1, 32>}, {pipeline_mode = #tpu.pipeline_mode<synchronous>, transform_indices = @transform_5, window_bounds = array<i64: 32, 32>}, {pipeline_mode = #tpu.pipeline_mode<synchronous>, transform_indices = @transform_6, window_bounds = array<i64: 1, 32>}, {transform_indices = @transform_7, window_bounds = array<i64: 32, 32>}]} {
    %c0 = arith.constant 0 : index
    %c0_0 = arith.constant 0 : index
    %0 = vector.load %arg1[%c0, %c0_0] : memref<32x16xf32, #tpu.memory_space<vmem>>, vector<32x16xf32>
    %c0_1 = arith.constant 0 : index
    %c0_2 = arith.constant 0 : index
    %1 = vector.load %arg2[%c0_1, %c0_2] : memref<16x32xf32, #tpu.memory_space<vmem>>, vector<16x32xf32>
    %cst = arith.constant dense<0.000000e+00> : vector<32x32xf32>
    %2 = tpu.matmul %0, %1, %cst {dimension_numbers = #tpu.dot_dimension_numbers<[1], [0], [0], [1], [0, 0, 1, 1], [], []>} : vector<32x16xf32>, vector<16x32xf32>, vector<32x32xf32> -> vector<32x32xf32>
    %c0_3 = arith.constant 0 : index
    %c0_4 = arith.constant 0 : index
    %3 = vector.load %arg3[%c0_3, %c0_4] : memref<1x32xf32, #tpu.memory_space<vmem>>, vector<1x32xf32>
    %4 = vector.broadcast %3 : vector<1x32xf32> to vector<32x32xf32>
    %5 = arith.addf %2, %4 : vector<32x32xf32>
    %cst_5 = arith.constant dense<0.000000e+00> : vector<32xf32>
    %6 = vector.multi_reduction <add>, %5, %cst_5 [1] : vector<32x32xf32> to vector<32xf32>
    %7 = vector.shape_cast %6 : vector<32xf32> to vector<32x1xf32>
    %cst_6 = arith.constant 3.200000e+01 : f32
    %8 = vector.broadcast %cst_6 : f32 to vector<32x1xf32>
    %9 = arith.divf %7, %8 : vector<32x1xf32>
    %10 = arith.mulf %5, %5 : vector<32x32xf32>
    %cst_7 = arith.constant dense<0.000000e+00> : vector<32xf32>
    %11 = vector.multi_reduction <add>, %10, %cst_7 [1] : vector<32x32xf32> to vector<32xf32>
    %12 = vector.shape_cast %11 : vector<32xf32> to vector<32x1xf32>
    %cst_8 = arith.constant 3.200000e+01 : f32
    %13 = vector.broadcast %cst_8 : f32 to vector<32x1xf32>
    %14 = arith.divf %12, %13 : vector<32x1xf32>
    %15 = arith.mulf %9, %9 : vector<32x1xf32>
    %16 = arith.subf %14, %15 : vector<32x1xf32>
    %cst_9 = arith.constant 0.000000e+00 : f32
    %17 = vector.broadcast %cst_9 : f32 to vector<32x1xf32>
    %18 = arith.maximumf %16, %17 : vector<32x1xf32>
    %19 = vector.broadcast %9 : vector<32x1xf32> to vector<32x32xf32>
    %20 = arith.subf %5, %19 : vector<32x32xf32>
    %cst_10 = arith.constant 9.99999974E-6 : f32
    %21 = vector.broadcast %cst_10 : f32 to vector<32x1xf32>
    %22 = arith.addf %18, %21 : vector<32x1xf32>
    %23 = math.rsqrt %22 : vector<32x1xf32>
    %24 = vector.broadcast %23 : vector<32x1xf32> to vector<32x32xf32>
    %25 = arith.mulf %20, %24 : vector<32x32xf32>
    %c0_11 = arith.constant 0 : index
    %c0_12 = arith.constant 0 : index
    %26 = vector.load %arg4[%c0_11, %c0_12] : memref<1x32xf32, #tpu.memory_space<vmem>>, vector<1x32xf32>
    %27 = vector.broadcast %26 : vector<1x32xf32> to vector<32x32xf32>
    %28 = arith.mulf %25, %27 : vector<32x32xf32>
    %c0_13 = arith.constant 0 : index
    %c0_14 = arith.constant 0 : index
    %29 = vector.load %arg5[%c0_13, %c0_14] : memref<1x32xf32, #tpu.memory_space<vmem>>, vector<1x32xf32>
    %30 = vector.broadcast %29 : vector<1x32xf32> to vector<32x32xf32>
    %31 = arith.addf %28, %30 : vector<32x32xf32>
    %cst_15 = arith.constant 0.000000e+00 : f32
    %32 = vector.broadcast %cst_15 : f32 to vector<32x32xf32>
    %33 = arith.maximumf %31, %32 : vector<32x32xf32>
    %c0_16 = arith.constant 0 : index
    %c0_17 = arith.constant 0 : index
    %34 = vector.load %arg6[%c0_16, %c0_17] : memref<32x32xf32, #tpu.memory_space<vmem>>, vector<32x32xf32>
    %cst_18 = arith.constant dense<0.000000e+00> : vector<32x32xf32>
    %35 = tpu.matmul %33, %34, %cst_18 {dimension_numbers = #tpu.dot_dimension_numbers<[1], [0], [0], [1], [0, 0, 1, 1], [], []>} : vector<32x32xf32>, vector<32x32xf32>, vector<32x32xf32> -> vector<32x32xf32>
    %c0_19 = arith.constant 0 : index
    %c0_20 = arith.constant 0 : index
    %36 = vector.load %arg7[%c0_19, %c0_20] : memref<1x32xf32, #tpu.memory_space<vmem>>, vector<1x32xf32>
    %37 = vector.broadcast %36 : vector<1x32xf32> to vector<32x32xf32>
    %38 = arith.addf %35, %37 : vector<32x32xf32>
    %c0_21 = arith.constant 0 : index
    %c0_22 = arith.constant 0 : index
    %39 = vector.load %arg8[%c0_21, %c0_22] : memref<32x32xf32, #tpu.memory_space<vmem>>, vector<32x32xf32>
    tpu.vector_store %arg8[%c0_21, %c0_22], %38 {strides = array<i32>} : memref<32x32xf32, #tpu.memory_space<vmem>>, vector<32x32xf32>,
    return
  }
  func.func @transform_0(%arg0: i32) -> (i32, i32) {
    %c0_i32 = arith.constant 0 : i32
    %c0_i32_0 = arith.constant 0 : i32
    return %arg0, %c0_i32 : i32, i32
  }
  func.func @transform_1(%arg0: i32) -> (i32, i32) {
    %c0_i32 = arith.constant 0 : i32
    %c0_i32_0 = arith.constant 0 : i32
    %c0_i32_1 = arith.constant 0 : i32
    return %c0_i32, %c0_i32_0 : i32, i32
  }
  func.func @transform_2(%arg0: i32) -> (i32, i32) {
    %c0_i32 = arith.constant 0 : i32
    %c0_i32_0 = arith.constant 0 : i32
    %c0_i32_1 = arith.constant 0 : i32
    return %c0_i32, %c0_i32_0 : i32, i32
  }
  func.func @transform_3(%arg0: i32) -> (i32, i32) {
    %c0_i32 = arith.constant 0 : i32
    %c0_i32_0 = arith.constant 0 : i32
    %c0_i32_1 = arith.constant 0 : i32
    return %c0_i32, %c0_i32_0 : i32, i32
  }
  func.func @transform_4(%arg0: i32) -> (i32, i32) {
    %c0_i32 = arith.constant 0 : i32
    %c0_i32_0 = arith.constant 0 : i32
    %c0_i32_1 = arith.constant 0 : i32
    return %c0_i32, %c0_i32_0 : i32, i32
  }
  func.func @transform_5(%arg0: i32) -> (i32, i32) {
    %c0_i32 = arith.constant 0 : i32
    %c0_i32_0 = arith.constant 0 : i32
    %c0_i32_1 = arith.constant 0 : i32
    return %c0_i32, %c0_i32_0 : i32, i32
  }
  func.func @transform_6(%arg0: i32) -> (i32, i32) {
    %c0_i32 = arith.constant 0 : i32
    %c0_i32_0 = arith.constant 0 : i32
    %c0_i32_1 = arith.constant 0 : i32
    return %c0_i32, %c0_i32_0 : i32, i32
  }
  func.func @transform_7(%arg0: i32) -> (i32, i32) {
    %c0_i32 = arith.constant 0 : i32
    %c0_i32_0 = arith.constant 0 : i32
    return %arg0, %c0_i32 : i32, i32
  }
}

</mosaic_0001>

<llo_original>
// kernel: tpu_custom_call.1
$region0: #{tpu_custom_call.1}
  #allocation0 [shape = 'u32[]', space=smem, size = 0x4, offset = 0x4, fixed_abs, tag = 'smem constant byte address 0x4 - core index']
  #allocation1 [shape = 'u32[144,128]{1,0:T(1,128)}', space=vmem, size = 0x12000, scoped, tag = 'internal scratch']
  %s0 = inlined_call_operand.vmem [shape: f32[32,16], index: 0, kind: input, shape index: {}]
  %s1 = inlined_call_operand.vmem [shape: f32[16,32], index: 1, kind: input, shape index: {}]
  %s2 = inlined_call_operand.vmem [shape: f32[1,32], index: 2, kind: input, shape index: {}]
  %s3 = inlined_call_operand.vmem [shape: f32[1,32], index: 3, kind: input, shape index: {}]
  %s4 = inlined_call_operand.vmem [shape: f32[1,32], index: 4, kind: input, shape index: {}]
  %s5 = inlined_call_operand.vmem [shape: f32[32,32], index: 5, kind: input, shape index: {}]
  %s6 = inlined_call_operand.vmem [shape: f32[1,32], index: 6, kind: input, shape index: {}]
  %s7 = inlined_call_operand.hbm [shape: f32[32,32], index: 7, kind: output, shape index: {}]
  %s8 = sld [smem:[#allocation0]]
  $region38: #{tpu_custom_call.1} parent=0
    _
  %s10 = ssub.s32 1, %s8
  %s11 = scalar_select 0, %s10, %s8
  $region1: #{tpu_custom_call.1} parent=0
    #allocation2 [shape = 'u8[16384]{0}', space=vmem, size = 0x4000, scoped, tag = 'output window, operand 0, single buffered']
    #allocation3 [shape = 's32[1]{0}', space=sflag, size = 0x4, scoped, tag = 'scoped memory for tpu_custom_call.1']
    %12 = vsyncpa [#allocation3], 0
    // Predicated region
    $region2: #{tpu_custom_call.1} parent=1 // pred_check
      _
    $region3: #{tpu_custom_call.1} parent=1 // pred_check_branch
      %14 = sbr.rel (0) target = $region5
    $region4: #{tpu_custom_call.1} parent=1 // pred_region
      _
    $region5: #{tpu_custom_call.1} parent=1 // pred_fallthru
      _
    // Predicated region
    $region6: #{tpu_custom_call.1} parent=1 // pred_check
      _
    $region7: #{tpu_custom_call.1} parent=1 // pred_check_branch
      %16 = sbr.rel (0) target = $region9
    $region8: #{tpu_custom_call.1} parent=1 // pred_region
      _
    $region9: #{tpu_custom_call.1} parent=1 // pred_fallthru
      _
    // Predicated region
    $region10: #{tpu_custom_call.1} parent=1 // pred_check
      _
    $region11: #{tpu_custom_call.1} parent=1 // pred_check_branch
      %18 = sbr.rel (0) target = $region13
    $region12: #{tpu_custom_call.1} parent=1 // pred_region
      _
    $region13: #{tpu_custom_call.1} parent=1 // pred_fallthru
      _
    // Predicated region
    $region14: #{tpu_custom_call.1} parent=1 // pred_check
      _
    $region15: #{tpu_custom_call.1} parent=1 // pred_check_branch
      %20 = sbr.rel (0) target = $region17
    $region16: #{tpu_custom_call.1} parent=1 // pred_region
      _
    $region17: #{tpu_custom_call.1} parent=1 // pred_fallthru
      _
    // Predicated region
    $region18: #{tpu_custom_call.1} parent=1 // pred_check
      _
    $region19: #{tpu_custom_call.1} parent=1 // pred_check_branch
      %22 = sbr.rel (0) target = $region21
    $region20: #{tpu_custom_call.1} parent=1 // pred_region
      _
    $region21: #{tpu_custom_call.1} parent=1 // pred_fallthru
      _
    // Predicated region
    $region22: #{tpu_custom_call.1} parent=1 // pred_check
      _
    $region23: #{tpu_custom_call.1} parent=1 // pred_check_branch
      %24 = sbr.rel (0) target = $region25
    $region24: #{tpu_custom_call.1} parent=1 // pred_region
      _
    $region25: #{tpu_custom_call.1} parent=1 // pred_fallthru
      _
    // Predicated region
    $region26: #{tpu_custom_call.1} parent=1 // pred_check
      _
    $region27: #{tpu_custom_call.1} parent=1 // pred_check_branch
      %26 = sbr.rel (0) target = $region29
    $region28: #{tpu_custom_call.1} parent=1 // pred_region
      _
    $region29: #{tpu_custom_call.1} parent=1 // pred_fallthru
      _
    %v27 = vld [vmem:[%s0] sm:$0xff]
    %v28 = vld [vmem:[%s0 + $0x8] sm:$0xff]
    %v29 = vld [vmem:[%s0 + $0x10] sm:$0xff]
    %v30 = vld [vmem:[%s0 + $0x18] sm:$0xff]
    %v31 = vld [vmem:[%s1] sm:$0xff]
    %v32 = vld [vmem:[%s1 + $0x8] sm:$0xff]
    %v33 = vld [vmem:[%s2] sm:$0x1]
    %v35 = vlaneseq
    %v36 = vshrl.u32 %v35, 7
    %v37 = vsub.s32 0, %v36
    %v38 = vrot.slane %v33, %v37
    %vm40 = vcmask 130048
    %v42 = vsel %vm40, %v27, 0
    %v45 = vsel %vm40, %v28, 0
    %v48 = vsel %vm40, %v29, 0
    %v51 = vsel %vm40, %v30, 0
    %53 = vmatprep.subr.mxu0 0.0
    %54 = vmatpush1.msra.mxu0 %v31
    %55 = vmatprep.subr.mxu0 0.0
    %56 = vmatpush1.msra.mxu0 %v32
    %57 = vmatprep.subr.mxu0 0.0
    %58 = vmatpush1.msra.mxu0 0.0
    %59 = vmatprep.subr.mxu0 0.0
    %60 = vmatpush1.msra.mxu0 0.0
    %61 = vmatprep.subr.mxu0 0.0
    %62 = vmatpush1.msra.mxu0 0.0
    %63 = vmatprep.subr.mxu0 0.0
    %64 = vmatpush1.msra.mxu0 0.0
    %65 = vmatprep.subr.mxu0 0.0
    %66 = vmatpush1.msra.mxu0 0.0
    %67 = vmatprep.subr.mxu0 0.0
    %68 = vmatpush1.msra.mxu0 0.0
    %69 = vmatprep.subr.mxu0 0.0
    %70 = vmatpush1.msra.mxu0 0.0
    %71 = vmatprep.subr.mxu0 0.0
    %72 = vmatpush1.msra.mxu0 0.0
    %73 = vmatprep.subr.mxu0 0.0
    %74 = vmatpush1.msra.mxu0 0.0
    %75 = vmatprep.subr.mxu0 0.0
    %76 = vmatpush1.msra.mxu0 0.0
    %77 = vmatprep.subr.mxu0 0.0
    %78 = vmatpush1.msra.mxu0 0.0
    %79 = vmatprep.subr.mxu0 0.0
    %80 = vmatpush1.msra.mxu0 0.0
    %81 = vmatprep.subr.mxu0 0.0
    %82 = vmatpush1.msra.mxu0 0.0
    %83 = vmatprep.subr.mxu0 0.0
    %84 = vmatpush1.msra.mxu0 0.0
    %85 = vmatprep.subr.mxu0 0.0
    %86 = vmatpush1.msra.mxu0 0.0
    %87 = vmatprep.subr.mxu0 0.0
    %88 = vmatpush1.msra.mxu0 0.0
    %89 = vmatprep.subr.mxu0 0.0
    %90 = vmatpush1.msra.mxu0 0.0
    %91 = vmatprep.subr.mxu0 0.0
    %92 = vmatpush1.msra.mxu0 0.0
    %93 = vmatprep.subr.mxu0 0.0
    %94 = vmatpush1.msra.mxu0 0.0
    %95 = vmatprep.subr.mxu0 0.0
    %96 = vmatpush1.msra.mxu0 0.0
    %97 = vmatprep.subr.mxu0 0.0
    %98 = vmatpush1.msra.mxu0 0.0
    %99 = vmatprep.subr.mxu0 0.0
    %100 = vmatpush1.msra.mxu0 0.0
    %101 = vmatprep.subr.mxu0 0.0
    %102 = vmatpush1.msra.mxu0 0.0
    %103 = vmatprep.subr.mxu0 0.0
    %104 = vmatpush1.msra.mxu0 0.0
    %105 = vmatprep.subr.mxu0 0.0
    %106 = vmatpush1.msra.mxu0 0.0
    %107 = vmatprep.subr.mxu0 0.0
    %108 = vmatpush1.msra.mxu0 0.0
    %109 = vmatprep.subr.mxu0 0.0
    %110 = vmatpush1.msra.mxu0 0.0
    %111 = vmatprep.subr.mxu0 0.0
    %112 = vmatpush1.msra.mxu0 0.0
    %113 = vmatprep.subr.mxu0 0.0
    %114 = vmatpush1.msra.mxu0 0.0
    %115 = vmatprep.subr.mxu0 0.0
    %116 = vmatpush1.msra.mxu0 0.0
    %117 = vmatprep.mubr.f32.mxu0 0.0
    %118 = vmatmul.mubr.f32.gmra.mrb[0].mxu0 %v42
    %v119 = vpop.f32.mrb[0].mxu0
    %v120 = vadd.f32 %v38, %v119
    %v121 = vpop.f32.mrb[0].mxu0
    %122 = vmatprep.mubr.f32.mxu0 0.0
    %123 = vmatmul.mubr.f32.gmra.mrb[0].mxu0 %v45
    %v124 = vpop.f32.mrb[0].mxu0
    %v125 = vadd.f32 %v38, %v124
    %v126 = vpop.f32.mrb[0].mxu0
    %127 = vmatprep.mubr.f32.mxu0 0.0
    %128 = vmatmul.mubr.f32.gmra.mrb[0].mxu0 %v48
    %v129 = vpop.f32.mrb[0].mxu0
    %v130 = vadd.f32 %v38, %v129
    %v131 = vpop.f32.mrb[0].mxu0
    %132 = vmatprep.mubr.f32.mxu0 0.0
    %133 = vmatmul.mubr.f32.gmra.mrb[0].mxu0 %v51
    %v134 = vpop.f32.mrb[0].mxu0
    %v135 = vadd.f32 %v38, %v134
    %v136 = vpop.f32.mrb[0].mxu0
    %137 = vdwg.mxu0
    %vm138 = vcmask 261120
    %v139 = vsel %vm138, %v120, 0.0
    %140 = vadd.xlane.f32.xlu0 %v139
    %v141 = vpop.xlane.xlu0 %140
    %v142 = vsel %vm138, %v125, 0.0
    %143 = vadd.xlane.f32.xlu0 %v142
    %v144 = vpop.xlane.xlu0 %143
    %v145 = vsel %vm138, %v130, 0.0
    %146 = vadd.xlane.f32.xlu0 %v145
    %v147 = vpop.xlane.xlu0 %146
    %v148 = vsel %vm138, %v135, 0.0
    %149 = vadd.xlane.f32.xlu0 %v148
    %v150 = vpop.xlane.xlu0 %149
    %v151 = vrcp.pop 32.0
    %v152 = vmul.f32 %v141, %v151
    %v153 = vmul.f32 %v144, %v151
    %v154 = vmul.f32 %v147, %v151
    %v155 = vmul.f32 %v150, %v151
    %v156 = vmul.f32 %v120, %v120
    %v157 = vmul.f32 %v125, %v125
    %v158 = vmul.f32 %v130, %v130
    %v159 = vmul.f32 %v135, %v135
    %v160 = vsel %vm138, %v156, 0.0
    %161 = vadd.xlane.f32.xlu0 %v160
    %v162 = vpop.xlane.xlu0 %161
    %v163 = vsel %vm138, %v157, 0.0
    %164 = vadd.xlane.f32.xlu0 %v163
    %v165 = vpop.xlane.xlu0 %164
    %v166 = vsel %vm138, %v158, 0.0
    %167 = vadd.xlane.f32.xlu0 %v166
    %v168 = vpop.xlane.xlu0 %167
    %v169 = vsel %vm138, %v159, 0.0
    %170 = vadd.xlane.f32.xlu0 %v169
    %v171 = vpop.xlane.xlu0 %170
    %v172 = vmul.f32 %v162, %v151
    %v173 = vmul.f32 %v165, %v151
    %v174 = vmul.f32 %v168, %v151
    %v175 = vmul.f32 %v171, %v151
    %v176 = vmul.f32 %v152, %v152
    %v177 = vmul.f32 %v153, %v153
    %v178 = vmul.f32 %v154, %v154
    %v179 = vmul.f32 %v155, %v155
    %v180 = vsub.f32 %v172, %v176
    %v181 = vsub.f32 %v173, %v177
    %v182 = vsub.f32 %v174, %v178
    %v183 = vsub.f32 %v175, %v179
    %v184 = vmax.f32 %v180, 0.0
    %v185 = vmax.f32 %v181, 0.0
    %v186 = vmax.f32 %v182, 0.0
    %v187 = vmax.f32 %v183, 0.0
    %v188 = vsub.f32 %v120, %v152
    %v189 = vsub.f32 %v125, %v153
    %v190 = vsub.f32 %v130, %v154
    %v191 = vsub.f32 %v135, %v155
    %v192 = vadd.f32 %v184, 1e-05
    %v193 = vadd.f32 %v185, 1e-05
    %v194 = vadd.f32 %v186, 1e-05
    %v195 = vadd.f32 %v187, 1e-05
    %v196 = vrsqrt.pop %v192
    %v197 = vrsqrt.pop %v193
    %v198 = vrsqrt.pop %v194
    %v199 = vrsqrt.pop %v195
    %v200 = vmul.f32 %v188, %v196
    %v201 = vmul.f32 %v189, %v197
    %v202 = vmul.f32 %v190, %v198
    %v203 = vmul.f32 %v191, %v199
    %v204 = vld [vmem:[%s3] sm:$0x1]
    %v206 = vlaneseq
    %v207 = vshrl.u32 %v206, 7
    %v208 = vsub.s32 0, %v207
    %v209 = vrot.slane %v204, %v208
    %v211 = vmul.f32 %v200, %v209
    %v212 = vmul.f32 %v201, %v209
    %v213 = vmul.f32 %v202, %v209
    %v214 = vmul.f32 %v203, %v209
    %v215 = vld [vmem:[%s4] sm:$0x1]
    %v217 = vlaneseq
    %v218 = vshrl.u32 %v217, 7
    %v219 = vsub.s32 0, %v218
    %v220 = vrot.slane %v215, %v219
    %v222 = vadd.f32 %v211, %v220
    %v223 = vadd.f32 %v212, %v220
    %v224 = vadd.f32 %v213, %v220
    %v225 = vadd.f32 %v214, %v220
    %v226 = vmax.f32 %v222, 0.0
    %v227 = vmax.f32 %v223, 0.0
    %v228 = vmax.f32 %v224, 0.0
    %v229 = vmax.f32 %v225, 0.0
    %v230 = vld [vmem:[%s5] sm:$0xff]
    %v231 = vld [vmem:[%s5 + $0x8] sm:$0xff]
    %v232 = vld [vmem:[%s5 + $0x10] sm:$0xff]
    %v233 = vld [vmem:[%s5 + $0x18] sm:$0xff]
    %v234 = vld [vmem:[%s6] sm:$0x1]
    %v236 = vlaneseq
    %v237 = vshrl.u32 %v236, 7
    %v238 = vsub.s32 0, %v237
    %v239 = vrot.slane %v234, %v238
    %v242 = vsel %vm138, %v226, 0
    %v245 = vsel %vm138, %v227, 0
    %v248 = vsel %vm138, %v228, 0
    %v251 = vsel %vm138, %v229, 0
    %253 = vmatprep.subr.mxu0 0.0
    %254 = vmatpush1.msra.mxu0 %v230
    %255 = vmatprep.subr.mxu0 0.0
    %256 = vmatpush1.msra.mxu0 %v231
    %257 = vmatprep.subr.mxu0 0.0
    %258 = vmatpush1.msra.mxu0 %v232
    %259 = vmatprep.subr.mxu0 0.0
    %260 = vmatpush1.msra.mxu0 %v233
    %261 = vmatprep.subr.mxu0 0.0
    %262 = vmatpush1.msra.mxu0 0.0
    %263 = vmatprep.subr.mxu0 0.0
    %264 = vmatpush1.msra.mxu0 0.0
    %265 = vmatprep.subr.mxu0 0.0
    %266 = vmatpush1.msra.mxu0 0.0
    %267 = vmatprep.subr.mxu0 0.0
    %268 = vmatpush1.msra.mxu0 0.0
    %269 = vmatprep.subr.mxu0 0.0
    %270 = vmatpush1.msra.mxu0 0.0
    %271 = vmatprep.subr.mxu0 0.0
    %272 = vmatpush1.msra.mxu0 0.0
    %273 = vmatprep.subr.mxu0 0.0
    %274 = vmatpush1.msra.mxu0 0.0
    %275 = vmatprep.subr.mxu0 0.0
    %276 = vmatpush1.msra.mxu0 0.0
    %277 = vmatprep.subr.mxu0 0.0
    %278 = vmatpush1.msra.mxu0 0.0
    %279 = vmatprep.subr.mxu0 0.0
    %280 = vmatpush1.msra.mxu0 0.0
    %281 = vmatprep.subr.mxu0 0.0
    %282 = vmatpush1.msra.mxu0 0.0
    %283 = vmatprep.subr.mxu0 0.0
    %284 = vmatpush1.msra.mxu0 0.0
    %285 = vmatprep.subr.mxu0 0.0
    %286 = vmatpush1.msra.mxu0 0.0
    %287 = vmatprep.subr.mxu0 0.0
    %288 = vmatpush1.msra.mxu0 0.0
    %289 = vmatprep.subr.mxu0 0.0
    %290 = vmatpush1.msra.mxu0 0.0
    %291 = vmatprep.subr.mxu0 0.0
    %292 = vmatpush1.msra.mxu0 0.0
    %293 = vmatprep.subr.mxu0 0.0
    %294 = vmatpush1.msra.mxu0 0.0
    %295 = vmatprep.subr.mxu0 0.0
    %296 = vmatpush1.msra.mxu0 0.0
    %297 = vmatprep.subr.mxu0 0.0
    %298 = vmatpush1.msra.mxu0 0.0
    %299 = vmatprep.subr.mxu0 0.0
    %300 = vmatpush1.msra.mxu0 0.0
    %301 = vmatprep.subr.mxu0 0.0
    %302 = vmatpush1.msra.mxu0 0.0
    %303 = vmatprep.subr.mxu0 0.0
    %304 = vmatpush1.msra.mxu0 0.0
    %305 = vmatprep.subr.mxu0 0.0
    %306 = vmatpush1.msra.mxu0 0.0
    %307 = vmatprep.subr.mxu0 0.0
    %308 = vmatpush1.msra.mxu0 0.0
    %309 = vmatprep.subr.mxu0 0.0
    %310 = vmatpush1.msra.mxu0 0.0
    %311 = vmatprep.subr.mxu0 0.0
    %312 = vmatpush1.msra.mxu0 0.0
    %313 = vmatprep.subr.mxu0 0.0
    %314 = vmatpush1.msra.mxu0 0.0
    %315 = vmatprep.subr.mxu0 0.0
    %316 = vmatpush1.msra.mxu0 0.0
    %317 = vmatprep.mubr.f32.mxu0 0.0
    %318 = vmatmul.mubr.f32.gmra.mrb[0].mxu0 %v242
    %v319 = vpop.f32.mrb[0].mxu0
    %v320 = vadd.f32 %v239, %v319
    %v321 = vpop.f32.mrb[0].mxu0
    %322 = vmatprep.mubr.f32.mxu0 0.0
    %323 = vmatmul.mubr.f32.gmra.mrb[0].mxu0 %v245
    %v324 = vpop.f32.mrb[0].mxu0
    %v325 = vadd.f32 %v239, %v324
    %v326 = vpop.f32.mrb[0].mxu0
    %327 = vmatprep.mubr.f32.mxu0 0.0
    %328 = vmatmul.mubr.f32.gmra.mrb[0].mxu0 %v248
    %v329 = vpop.f32.mrb[0].mxu0
    %v330 = vadd.f32 %v239, %v329
    %v331 = vpop.f32.mrb[0].mxu0
    %332 = vmatprep.mubr.f32.mxu0 0.0
    %333 = vmatmul.mubr.f32.gmra.mrb[0].mxu0 %v251
    %v334 = vpop.f32.mrb[0].mxu0
    %v335 = vadd.f32 %v239, %v334
    %v336 = vpop.f32.mrb[0].mxu0
    %337 = vdwg.mxu0
    %338 = vst.msk [vmem:[#allocation2] sm:$0xff] %vm138, %v320
    %339 = vst.msk [vmem:[#allocation2 + $0x8] sm:$0xff] %vm138, %v325
    %340 = vst.msk [vmem:[#allocation2 + $0x10] sm:$0xff] %vm138, %v330
    %341 = vst.msk [vmem:[#allocation2 + $0x18] sm:$0xff] %vm138, %v335
    // Predicated region
    $region30: #{tpu_custom_call.1} parent=1 // pred_check
      _
    $region31: #{tpu_custom_call.1} parent=1 // pred_check_branch
      %343 = sbr.rel (0) target = $region33
    $region32: #{tpu_custom_call.1} parent=1 // pred_region
      %s345 = ssub.s32 512, 512
      %346 = vsyncadd [#allocation3], %s345
      %s347 = sshll.u32 [#allocation2], 4
      %s348 = int_to_ptr.vmem [resolvable:$true] %s347
      %353 = dma.vmem_to_hbm [thread:$0]  %s348, 512, %s7, [#allocation3], 128, 128, 8
    $region33: #{tpu_custom_call.1} parent=1 // pred_fallthru
      _
    // Predicated region
    $region34: #{tpu_custom_call.1} parent=1 // pred_check
      _
    $region35: #{tpu_custom_call.1} parent=1 // pred_check_branch
      %355 = sbr.rel (0) target = $region37
    $region36: #{tpu_custom_call.1} parent=1 // pred_region
      %356 = dma.done [#allocation3], 512
    $region37: #{tpu_custom_call.1} parent=1 // pred_fallthru
      _
    %357 = vsyncpa [#allocation3], 1

</llo_original>
